<compile_context>
chip_gen: v5e
topology: v5e:2x2
jax: 0.10.0
libtpu: 0.0.40
codegen_flags: <defaults>
</compile_context>

<pallas_src>
import functools

import jax
import jax.numpy as jnp
from jax.experimental import pallas as pl
from jax.experimental.pallas import tpu as pltpu

LANE = 128       # lane width
SUB_BF16 = 16    # bf16 sublane multiple


def _round_up(n, m):
    return ((n + m - 1) // m) * m


def _mlp_kernel(x_ref, w1_ref, w2_ref, p_ref, o_ref, *, h1p, h3p):
    # x_ref:  (TB, D)    input tile, natural layout (batch on sublanes)
    # w1_ref: (H1p, D)   bf16;  w2_ref: (H3p, H1p) bf16
    # p_ref:  (Hp, 4)    f32 pack: col0 = b1, col1 = b2, col2 = w3, [0,3] = b3
    # o_ref:  (1, TB)    lane-dense output row
    b1 = p_ref[0:h1p, 0:1]
    b2 = p_ref[0:h3p, 1:2]
    w3 = p_ref[0:h3p, 2:3]
    b3 = p_ref[0:1, 3:4]

    # Cast x to bf16 in VMEM (cheap VPU work hidden under DMA) instead of in HBM.
    x_bf = x_ref[...].astype(jnp.bfloat16)

    # fc1: contract D of (H1p, D) with D of (TB, D) -> (H1p, TB).
    # MXU consumes x in its natural layout; the result lands with the batch on
    # the 128-lane axis (transposed activation layout) for the rest of the net.
    h = jax.lax.dot_general(w1_ref[...], x_bf,
                            dimension_numbers=(((1,), (1,)), ((), ())),
                            preferred_element_type=jnp.float32)
    h = jnp.maximum(h + b1, 0.0)                      # f32 bias + ReLU (VPU)

    # fc2: (H3p, H1p) @ (H1p, TB) -> (H3p, TB)
    h = jnp.dot(w2_ref[...], h.astype(jnp.bfloat16),
                preferred_element_type=jnp.float32)
    h = jnp.maximum(h + b2, 0.0)

    # fc3: single output unit -> VPU multiply + sublane reduce (XLU) instead of
    # a pathological N=1 MXU matmul; produces a lane-dense (1, TB) row.
    out = jnp.sum(h * w3, axis=0, keepdims=True) + b3
    o_ref[...] = out.astype(o_ref.dtype)


def prepare_params(w1, b1, w2, b2, w3, b3):
    """One-time parameter prep (hoisted out of the per-call path):
    bf16 cast + sublane padding of the weights, and packing of the small params
    (b1, b2, w3, b3) into a single (Hp, 4) f32 array -> fewer tiny DMAs.
    Weights are in PyTorch nn.Linear (out_features, in_features) layout."""
    h1, d = w1.shape
    h3, h2 = w2.shape
    assert h2 == h1, "module only composes when h1 == h2"
    assert w3.shape == (1, h3)

    h1p = _round_up(h1, SUB_BF16)
    h3p = _round_up(h3, SUB_BF16)
    hp = max(h1p, h3p)

    w1p = jnp.zeros((h1p, d), jnp.bfloat16).at[:h1, :].set(w1.astype(jnp.bfloat16))
    w2p = jnp.zeros((h3p, h1p), jnp.bfloat16).at[:h3, :h1].set(w2.astype(jnp.bfloat16))
    pack = jnp.zeros((hp, 4), jnp.float32)
    pack = pack.at[:h1, 0].set(b1)
    pack = pack.at[:h3, 1].set(b2)
    pack = pack.at[:h3, 2].set(w3[0, :])
    pack = pack.at[0, 3].set(b3[0])
    return dict(w1p=w1p, w2p=w2p, pack=pack, d=d, h1p=h1p, h3p=h3p, hp=hp)


def mlp_forward(x, prepared, *, block_b=4096):
    """Forward pass of `net`; `prepared` comes from prepare_params()."""
    B, d = x.shape
    assert d == prepared["d"]
    w1p, w2p, pack = prepared["w1p"], prepared["w2p"], prepared["pack"]
    h1p, h3p, hp = prepared["h1p"], prepared["h3p"], prepared["hp"]

    # Batch tile: lane-aligned (defensively round block_b up to 128), big enough
    # to amortize per-grid-step overhead, but split so nb >= 2 whenever possible
    # (v7x megacore sharding of the "parallel" batch axis).
    block_b = max(LANE, _round_up(block_b, LANE))
    tb = min(block_b, _round_up(-(-B // 2), LANE))
    b_pad = _round_up(B, tb)
    nb = b_pad // tb

    # Pad along batch only (and only when needed); features stay un-padded.
    if b_pad != B:
        x_in = jnp.zeros((b_pad, d), x.dtype).at[:B, :].set(x)
    else:
        x_in = x

    itemsize = x_in.dtype.itemsize
    flops = 2 * b_pad * (h1p * d + h3p * h1p + h3p)
    bytes_accessed = (x_in.size * itemsize + w1p.size * 2 + w2p.size * 2
                      + pack.size * 4 + b_pad * 4)
    vmem_bytes = (2 * tb * d * itemsize           # double-buffered x tile
                  + 2 * tb * 4                    # double-buffered output row
                  + w1p.size * 2 + w2p.size * 2 + pack.size * 4   # resident weights
                  + tb * d * 2                    # bf16 cast of the x tile
                  + tb * (h1p + h3p + 1) * 4)     # f32 intermediates
    vmem_limit = int(min(100 * 2**20, max(8 * 2**20, 2 * vmem_bytes)))

    out = pl.pallas_call(
        functools.partial(_mlp_kernel, h1p=h1p, h3p=h3p),
        out_shape=jax.ShapeDtypeStruct((1, b_pad), jnp.float32),
        grid=(nb,),
        in_specs=[
            pl.BlockSpec((tb, d), lambda i: (i, 0)),        # x tile (pipelined)
            pl.BlockSpec((h1p, d), lambda i: (0, 0)),       # resident weights
            pl.BlockSpec((h3p, h1p), lambda i: (0, 0)),
            pl.BlockSpec((hp, 4), lambda i: (0, 0)),        # packed b1/b2/w3/b3
        ],
        out_specs=pl.BlockSpec((1, tb), lambda i: (0, i)),  # lane-dense output
        compiler_params=pltpu.CompilerParams(
            dimension_semantics=("parallel",),              # megacore on v7x
            vmem_limit_bytes=vmem_limit,
        ),
        cost_estimate=pl.CostEstimate(
            flops=flops, transcendentals=0, bytes_accessed=bytes_accessed),
    )(x_in, w1p, w2p, pack)

    # Padded batch columns carry nonzero garbage (relu(b1) propagated); slice off.
    return out[0, :B].reshape(B, 1)


def init_params(key, input_size, h1, h2, h3):
    # nn.Linear-style init, PyTorch (out_features, in_features) layout.
    ks = jax.random.split(key, 6)

    def lin(kw, kb, fan_in, fan_out):
        bound = fan_in ** -0.5
        w = jax.random.uniform(kw, (fan_out, fan_in), jnp.float32, -bound, bound)
        b = jax.random.uniform(kb, (fan_out,), jnp.float32, -bound, bound)
        return w, b

    w1, b1 = lin(ks[0], ks[1], input_size, h1)
    w2, b2 = lin(ks[2], ks[3], h2, h3)
    w3, b3 = lin(ks[4], ks[5], h3, 1)
    return w1, b1, w2, b2, w3, b3


def reference(x, w1, b1, w2, b2, w3, b3):
    # Pure-JAX reference mirroring the kernel's bf16 operand rounding with
    # f32 accumulation (deviates from fp32 PyTorch at the ~1e-3 level).
    hi = jax.lax.Precision.HIGHEST
    bf = lambda a: a.astype(jnp.bfloat16).astype(jnp.float32)
    h = jnp.maximum(jnp.dot(bf(x), bf(w1).T, precision=hi) + b1, 0.0)
    h = jnp.maximum(jnp.dot(bf(h), bf(w2).T, precision=hi) + b2, 0.0)
    return jnp.dot(h, w3.T, precision=hi) + b3


if __name__ == "__main__":
    input_size, h1, h2, h3 = 32, 32, 32, 16
    key = jax.random.PRNGKey(0)
    kx, kp = jax.random.split(key)
    raw = init_params(kp, input_size, h1, h2, h3)
    prepared = prepare_params(*raw)   # one-time prep, hoisted out of forward

    # (batch, block_b): single-tile case, a multi-tile + non-multiple-batch
    # (padding) case, and an exactly-divisible 2-tile case.
    cases = [(8, 4096), (300, 256), (1024, 512)]
    for B, blk in cases:
        x = jax.random.normal(jax.random.fold_in(kx, B), (B, input_size),
                              jnp.float32)
        out = mlp_forward(x, prepared, block_b=blk)
        jax.block_until_ready(out)
        ref = reference(x, *raw)
        assert out.shape == (B, 1)
        err = float(jnp.max(jnp.abs(out - ref)))
        assert jnp.allclose(out, ref, atol=2e-3, rtol=2e-3), (
            f"B={B}: max abs err {err}")

    print("KERNEL_OK")
</pallas_src>

<mosaic_0001>
module attributes {stable_mosaic.version = 11 : i64} {
  func.func @_mlp_kernel(%arg0: i32, %arg1: memref<128x32xf32, #tpu.memory_space<vmem>>, %arg2: memref<32x32xbf16, #tpu.memory_space<vmem>>, %arg3: memref<16x32xbf16, #tpu.memory_space<vmem>>, %arg4: memref<32x4xf32, #tpu.memory_space<vmem>>, %arg5: memref<1x128xf32, #tpu.memory_space<vmem>>) attributes {dimension_semantics = [#tpu.dimension_semantics<parallel>], iteration_bounds = array<i64: 1>, scalar_prefetch = 0 : i64, scratch_operands = 0 : i64, tpu.core_type = #tpu.core_type<tc>, window_params = [{transform_indices = @transform_0, window_bounds = array<i64: 128, 32>}, {pipeline_mode = #tpu.pipeline_mode<synchronous>, transform_indices = @transform_1, window_bounds = array<i64: 32, 32>}, {pipeline_mode = #tpu.pipeline_mode<synchronous>, transform_indices = @transform_2, window_bounds = array<i64: 16, 32>}, {pipeline_mode = #tpu.pipeline_mode<synchronous>, transform_indices = @transform_3, window_bounds = array<i64: 32, 4>}, {transform_indices = @transform_4, window_bounds = array<i64: 1, 128>}]} {
    %c0 = arith.constant 0 : index
    %c0_0 = arith.constant 0 : index
    %0 = vector.load %arg4[%c0, %c0_0] : memref<32x4xf32, #tpu.memory_space<vmem>>, vector<32x1xf32>
    %c0_1 = arith.constant 0 : index
    %c1 = arith.constant 1 : index
    %1 = vector.load %arg4[%c0_1, %c1] : memref<32x4xf32, #tpu.memory_space<vmem>>, vector<16x1xf32>
    %c0_2 = arith.constant 0 : index
    %c2 = arith.constant 2 : index
    %2 = vector.load %arg4[%c0_2, %c2] : memref<32x4xf32, #tpu.memory_space<vmem>>, vector<16x1xf32>
    %c0_3 = arith.constant 0 : index
    %c3 = arith.constant 3 : index
    %3 = vector.load %arg4[%c0_3, %c3] : memref<32x4xf32, #tpu.memory_space<vmem>>, vector<1x1xf32>
    %c0_4 = arith.constant 0 : index
    %c0_5 = arith.constant 0 : index
    %4 = vector.load %arg1[%c0_4, %c0_5] : memref<128x32xf32, #tpu.memory_space<vmem>>, vector<128x32xf32>
    %5 = arith.truncf %4 : vector<128x32xf32> to vector<128x32xbf16>
    %c0_6 = arith.constant 0 : index
    %c0_7 = arith.constant 0 : index
    %6 = vector.load %arg2[%c0_6, %c0_7] : memref<32x32xbf16, #tpu.memory_space<vmem>>, vector<32x32xbf16>
    %cst = arith.constant dense<0.000000e+00> : vector<32x128xf32>
    %7 = tpu.matmul %6, %5, %cst {dimension_numbers = #tpu.dot_dimension_numbers<[1], [1], [0], [0], [0, 0, 1, 0], [], []>} : vector<32x32xbf16>, vector<128x32xbf16>, vector<32x128xf32> -> vector<32x128xf32>
    %8 = vector.broadcast %0 : vector<32x1xf32> to vector<32x128xf32>
    %9 = arith.addf %7, %8 : vector<32x128xf32>
    %cst_8 = arith.constant 0.000000e+00 : f32
    %10 = vector.broadcast %cst_8 : f32 to vector<32x128xf32>
    %11 = arith.maximumf %9, %10 : vector<32x128xf32>
    %c0_9 = arith.constant 0 : index
    %c0_10 = arith.constant 0 : index
    %12 = vector.load %arg3[%c0_9, %c0_10] : memref<16x32xbf16, #tpu.memory_space<vmem>>, vector<16x32xbf16>
    %13 = arith.truncf %11 : vector<32x128xf32> to vector<32x128xbf16>
    %cst_11 = arith.constant dense<0.000000e+00> : vector<16x128xf32>
    %14 = tpu.matmul %12, %13, %cst_11 {dimension_numbers = #tpu.dot_dimension_numbers<[1], [0], [0], [1], [0, 0, 1, 1], [], []>} : vector<16x32xbf16>, vector<32x128xbf16>, vector<16x128xf32> -> vector<16x128xf32>
    %15 = vector.broadcast %1 : vector<16x1xf32> to vector<16x128xf32>
    %16 = arith.addf %14, %15 : vector<16x128xf32>
    %cst_12 = arith.constant 0.000000e+00 : f32
    %17 = vector.broadcast %cst_12 : f32 to vector<16x128xf32>
    %18 = arith.maximumf %16, %17 : vector<16x128xf32>
    %19 = vector.broadcast %2 : vector<16x1xf32> to vector<16x128xf32>
    %20 = arith.mulf %18, %19 : vector<16x128xf32>
    %cst_13 = arith.constant dense<0.000000e+00> : vector<128xf32>
    %21 = vector.multi_reduction <add>, %20, %cst_13 [0] : vector<16x128xf32> to vector<128xf32>
    %22 = vector.shape_cast %21 : vector<128xf32> to vector<1x128xf32>
    %23 = vector.broadcast %3 : vector<1x1xf32> to vector<1x128xf32>
    %24 = arith.addf %22, %23 : vector<1x128xf32>
    %c0_14 = arith.constant 0 : index
    %c0_15 = arith.constant 0 : index
    %25 = vector.load %arg5[%c0_14, %c0_15] : memref<1x128xf32, #tpu.memory_space<vmem>>, vector<1x128xf32>
    tpu.vector_store %arg5[%c0_14, %c0_15], %24 {strides = array<i32>} : memref<1x128xf32, #tpu.memory_space<vmem>>, vector<1x128xf32>,
    return
  }
  func.func @transform_0(%arg0: i32) -> (i32, i32) {
    %c0_i32 = arith.constant 0 : i32
    %c0_i32_0 = arith.constant 0 : i32
    return %arg0, %c0_i32 : i32, i32
  }
  func.func @transform_1(%arg0: i32) -> (i32, i32) {
    %c0_i32 = arith.constant 0 : i32
    %c0_i32_0 = arith.constant 0 : i32
    %c0_i32_1 = arith.constant 0 : i32
    return %c0_i32, %c0_i32_0 : i32, i32
  }
  func.func @transform_2(%arg0: i32) -> (i32, i32) {
    %c0_i32 = arith.constant 0 : i32
    %c0_i32_0 = arith.constant 0 : i32
    %c0_i32_1 = arith.constant 0 : i32
    return %c0_i32, %c0_i32_0 : i32, i32
  }
  func.func @transform_3(%arg0: i32) -> (i32, i32) {
    %c0_i32 = arith.constant 0 : i32
    %c0_i32_0 = arith.constant 0 : i32
    %c0_i32_1 = arith.constant 0 : i32
    return %c0_i32, %c0_i32_0 : i32, i32
  }
  func.func @transform_4(%arg0: i32) -> (i32, i32) {
    %c0_i32 = arith.constant 0 : i32
    %c0_i32_0 = arith.constant 0 : i32
    return %c0_i32, %arg0 : i32, i32
  }
}

</mosaic_0001>

<llo_original>
// kernel: tpu_custom_call.1
$region0: #{tpu_custom_call.1}
  #allocation0 [shape = 'u32[]', space=smem, size = 0x4, offset = 0x4, fixed_abs, tag = 'smem constant byte address 0x4 - core index']
  #allocation1 [shape = 'u32[72,128]{1,0:T(1,128)}', space=vmem, size = 0x9000, scoped, tag = 'internal scratch']
  %s0 = inlined_call_operand.vmem [shape: f32[128,32], index: 0, kind: input, shape index: {}]
  %s1 = inlined_call_operand.vmem [shape: bf16[32,32], index: 1, kind: input, shape index: {}]
  %s2 = inlined_call_operand.vmem [shape: bf16[16,32], index: 2, kind: input, shape index: {}]
  %s3 = inlined_call_operand.vmem [shape: f32[32,4], index: 3, kind: input, shape index: {}]
  %s4 = inlined_call_operand.hbm [shape: f32[1,128], index: 4, kind: output, shape index: {}]
  %s5 = sld [smem:[#allocation0]]
  $region26: #{tpu_custom_call.1} parent=0
    _
  %s7 = ssub.s32 1, %s5
  %s8 = scalar_select 0, %s7, %s5
  $region1: #{tpu_custom_call.1} parent=0
    #allocation2 [shape = 'u8[512]{0}', space=vmem, size = 0x400, scoped, tag = 'output window, operand 0, single buffered']
    #allocation3 [shape = 's32[1]{0}', space=sflag, size = 0x4, scoped, tag = 'scoped memory for tpu_custom_call.1']
    %9 = vsyncpa [#allocation3], 0
    // Predicated region
    $region2: #{tpu_custom_call.1} parent=1 // pred_check
      _
    $region3: #{tpu_custom_call.1} parent=1 // pred_check_branch
      %11 = sbr.rel (0) target = $region5
    $region4: #{tpu_custom_call.1} parent=1 // pred_region
      _
    $region5: #{tpu_custom_call.1} parent=1 // pred_fallthru
      _
    // Predicated region
    $region6: #{tpu_custom_call.1} parent=1 // pred_check
      _
    $region7: #{tpu_custom_call.1} parent=1 // pred_check_branch
      %13 = sbr.rel (0) target = $region9
    $region8: #{tpu_custom_call.1} parent=1 // pred_region
      _
    $region9: #{tpu_custom_call.1} parent=1 // pred_fallthru
      _
    // Predicated region
    $region10: #{tpu_custom_call.1} parent=1 // pred_check
      _
    $region11: #{tpu_custom_call.1} parent=1 // pred_check_branch
      %15 = sbr.rel (0) target = $region13
    $region12: #{tpu_custom_call.1} parent=1 // pred_region
      _
    $region13: #{tpu_custom_call.1} parent=1 // pred_fallthru
      _
    // Predicated region
    $region14: #{tpu_custom_call.1} parent=1 // pred_check
      _
    $region15: #{tpu_custom_call.1} parent=1 // pred_check_branch
      %17 = sbr.rel (0) target = $region17
    $region16: #{tpu_custom_call.1} parent=1 // pred_region
      _
    $region17: #{tpu_custom_call.1} parent=1 // pred_fallthru
      _
    %v19 = vld [vmem:[%s3] sm:$0xff]
    %v20 = vld [vmem:[%s3 + $0x8] sm:$0xff]
    %v21 = vld [vmem:[%s3 + $0x10] sm:$0xff]
    %v22 = vld [vmem:[%s3 + $0x18] sm:$0xff]
    %v23 = vld [vmem:[%s3] sm:$0x1]
    %v24 = vld [vmem:[%s0] sm:$0xff]
    %v25 = vld [vmem:[%s0 + $0x8] sm:$0xff]
    %v26 = vld [vmem:[%s0 + $0x10] sm:$0xff]
    %v27 = vld [vmem:[%s0 + $0x18] sm:$0xff]
    %v28 = vld [vmem:[%s0 + $0x20] sm:$0xff]
    %v29 = vld [vmem:[%s0 + $0x28] sm:$0xff]
    %v30 = vld [vmem:[%s0 + $0x30] sm:$0xff]
    %v31 = vld [vmem:[%s0 + $0x38] sm:$0xff]
    %v32 = vld [vmem:[%s0 + $0x40] sm:$0xff]
    %v33 = vld [vmem:[%s0 + $0x48] sm:$0xff]
    %v34 = vld [vmem:[%s0 + $0x50] sm:$0xff]
    %v35 = vld [vmem:[%s0 + $0x58] sm:$0xff]
    %v36 = vld [vmem:[%s0 + $0x60] sm:$0xff]
    %v37 = vld [vmem:[%s0 + $0x68] sm:$0xff]
    %v38 = vld [vmem:[%s0 + $0x70] sm:$0xff]
    %v39 = vld [vmem:[%s0 + $0x78] sm:$0xff]
    %v40 = vpack.c.bf16 %v25, %v24
    %v41 = vpack.c.bf16 %v27, %v26
    %v42 = vpack.c.bf16 %v29, %v28
    %v43 = vpack.c.bf16 %v31, %v30
    %v44 = vpack.c.bf16 %v33, %v32
    %v45 = vpack.c.bf16 %v35, %v34
    %v46 = vpack.c.bf16 %v37, %v36
    %v47 = vpack.c.bf16 %v39, %v38
    %v48 = vld [vmem:[%s1] sm:$0xf]
    %v49 = vld [vmem:[%s1 + $0x4] sm:$0xf]
    %v50 = vld [vmem:[%s1 + $0x8] sm:$0xf]
    %v51 = vld [vmem:[%s1 + $0xc] sm:$0xf]
    %53 = vset.pattern.permute.xlu0 0
    %54 = vperm.xlu0 %53, %v19
    %v55 = vpop.permute.xlu0 %54
    %58 = vset.pattern.permute.xlu0 0
    %59 = vperm.xlu0 %58, %v20
    %v60 = vpop.permute.xlu0 %59
    %63 = vset.pattern.permute.xlu0 0
    %64 = vperm.xlu0 %63, %v21
    %v65 = vpop.permute.xlu0 %64
    %68 = vset.pattern.permute.xlu0 0
    %69 = vperm.xlu0 %68, %v22
    %v70 = vpop.permute.xlu0 %69
    %v76 = vunpack.c.l.b16 %v48
    %v77 = vunpack.c.l.b16 %v49
    %v78 = vunpack.c.l.b16 %v50
    %v79 = vunpack.c.l.b16 %v51
    %v80 = vpack.c.b16 %v77, %v76
    %v81 = vpack.c.b16 %v79, %v78
    %vm82 = vcmask 261120
    %v84 = vsel %vm82, %v80, 0
    %v87 = vsel %vm82, %v81, 0
    %v90 = vsel %vm82, %v40, 0
    %v93 = vsel %vm82, %v41, 0
    %v96 = vsel %vm82, %v42, 0
    %v99 = vsel %vm82, %v43, 0
    %v102 = vsel %vm82, %v44, 0
    %v105 = vsel %vm82, %v45, 0
    %v108 = vsel %vm82, %v46, 0
    %v111 = vsel %vm82, %v47, 0
    %113 = vmatpush.bf16.xpose.msra.mxu0 %v111
    %114 = vmatpush.bf16.xpose.msra.mxu0 %v108
    %115 = vmatpush.bf16.xpose.msra.mxu0 %v105
    %116 = vmatpush.bf16.xpose.msra.mxu0 %v102
    %117 = vmatpush.bf16.xpose.msra.mxu0 %v99
    %118 = vmatpush.bf16.xpose.msra.mxu0 %v96
    %119 = vmatpush.bf16.xpose.msra.mxu0 %v93
    %120 = vmatpush.bf16.xpose.msra.mxu0 %v90
    %121 = vmatmul.bf16.gmra.mxu0 %v84
    %v122 = vpop.f32.mrf.mxu0
    %v123 = vadd.f32 %v55, %v122
    %v124 = vpop.f32.mrf.mxu0
    %v125 = vadd.f32 %v60, %v124
    %126 = vmatmul.bf16.gmra.mxu0 %v87
    %v127 = vpop.f32.mrf.mxu0
    %v128 = vadd.f32 %v65, %v127
    %v129 = vpop.f32.mrf.mxu0
    %v130 = vadd.f32 %v70, %v129
    %131 = vdwg.mxu0
    %v132 = vmax.f32 %v123, 0.0
    %v133 = vmax.f32 %v125, 0.0
    %v134 = vmax.f32 %v128, 0.0
    %v135 = vmax.f32 %v130, 0.0
    %v136 = vld [vmem:[%s2] sm:$0xf]
    %v137 = vld [vmem:[%s2 + $0x4] sm:$0xf]
    %v138 = vpack.c.bf16 %v133, %v132
    %v139 = vpack.c.bf16 %v135, %v134
    %140 = vset.pattern.permute.xlu0 1
    %141 = vperm.xlu0 %140, %v19
    %v142 = vpop.permute.xlu0 %141
    %144 = vset.pattern.permute.xlu0 1
    %145 = vperm.xlu0 %144, %v20
    %v146 = vpop.permute.xlu0 %145
    %v150 = vunpack.c.l.b16 %v136
    %v151 = vunpack.c.l.b16 %v137
    %v152 = vpack.c.b16 %v151, %v150
    %v154 = vsel %vm82, %v152, 0
    %156 = vmatpush.bf16.msra.mxu0 0
    %157 = vmatpush.bf16.msra.mxu0 0
    %158 = vmatpush.bf16.msra.mxu0 0
    %159 = vmatpush.bf16.msra.mxu0 0
    %160 = vmatpush.bf16.msra.mxu0 0
    %161 = vmatpush.bf16.msra.mxu0 0
    %162 = vmatpush.bf16.msra.mxu0 %v139
    %163 = vmatpush.bf16.msra.mxu0 %v138
    %164 = vmatmul.bf16.gmra.mxu0 %v154
    %v165 = vpop.f32.mrf.mxu0
    %v166 = vadd.f32 %v142, %v165
    %v167 = vpop.f32.mrf.mxu0
    %v168 = vadd.f32 %v146, %v167
    %169 = vdwg.mxu0
    %v170 = vmax.f32 %v166, 0.0
    %v171 = vmax.f32 %v168, 0.0
    %172 = vset.pattern.permute.xlu0 2
    %173 = vperm.xlu0 %172, %v19
    %v174 = vpop.permute.xlu0 %173
    %176 = vset.pattern.permute.xlu0 2
    %177 = vperm.xlu0 %176, %v20
    %v178 = vpop.permute.xlu0 %177
    %v180 = vmul.f32 %v170, %v174
    %v181 = vmul.f32 %v171, %v178
    %v182 = vadd.f32 %v180, %v181
    %v183 = vrot.slane %v182, 4
    %v184 = vadd.f32 %v182, %v183
    %v185 = vrot.slane %v184, 2
    %v186 = vadd.f32 %v184, %v185
    %v187 = vrot.slane %v186, 1
    %v188 = vadd.f32 %v186, %v187
    %190 = vset.pattern.permute.xlu0 3
    %191 = vperm.xlu0 %190, %v23
    %v192 = vpop.permute.xlu0 %191
    %v194 = vadd.f32 %v188, %v192
    %195 = vst [vmem:[#allocation2] sm:$0x1] %v194
    // Predicated region
    $region18: #{tpu_custom_call.1} parent=1 // pred_check
      _
    $region19: #{tpu_custom_call.1} parent=1 // pred_check_branch
      %197 = sbr.rel (0) target = $region21
    $region20: #{tpu_custom_call.1} parent=1 // pred_region
      %199 = vsyncadd [#allocation3], 0
      %s201 = sshll.u32 [#allocation2], 4
      %s202 = int_to_ptr.vmem [resolvable:$true] %s201
      %s203 = sshll.u32 %s4, 4
      %s204 = int_to_ptr.hbm [resolvable:$true] %s203
      %206 = dma.vmem_to_hbm [thread:$0]  %s202, 16, %s204, [#allocation3]
    $region21: #{tpu_custom_call.1} parent=1 // pred_fallthru
      _
    // Predicated region
    $region22: #{tpu_custom_call.1} parent=1 // pred_check
      _
    $region23: #{tpu_custom_call.1} parent=1 // pred_check_branch
      %208 = sbr.rel (0) target = $region25
    $region24: #{tpu_custom_call.1} parent=1 // pred_region
      %210 = dma.done [#allocation3], 16
    $region25: #{tpu_custom_call.1} parent=1 // pred_fallthru
      _
    %211 = vsyncpa [#allocation3], 1

</llo_original>
